<compile_context>
chip_gen: v7x
topology: tpu7x:2x2x1
jax: 0.10.0
libtpu: 0.0.40
codegen_flags: <defaults>
</compile_context>

<pallas_src>
import functools
import math

import jax
import jax.numpy as jnp
from jax.experimental import pallas as pl
from jax.experimental.pallas import tpu as pltpu

_INV_SQRT2 = 1.0 / math.sqrt(2.0)
_TANH_C = math.sqrt(2.0 / math.pi)
_LANE_ALIGN = 256  # multiple of the 128-lane vreg; native v6e/v7x MXU tile


def _physical_vmem_bytes():
    """Physical VMEM of the attached chip; conservative 64 MiB fallback if unqueryable."""
    try:
        return int(pltpu.get_tpu_info().vmem_capacity_bytes)
    except Exception:
        return 64 * 1024 * 1024


def _vmem_working_set(tm, tn, H, x_item, w_item, o_item, w_buffers):
    """Rough per-step VMEM footprint: double-buffered BlockSpec tiles plus the f32
    (tm, tn) epilogue temporaries Mosaic materializes for y / GELU."""
    return (w_buffers * H * tn * w_item      # weight column tile(s)
            + 2 * tm * H * x_item            # activation row tile, double-buffered
            + 2 * tm * tn * o_item           # output tile, double-buffered
            + 2 * tn * 4                     # f32 bias tile
            + 2 * tm * tn * 4)               # f32 y / gelu temporaries


def _bert_intermediate_kernel(x_ref, w_ref, b_ref, o_ref, *, approximate_gelu):
    # x_ref: (tm, H)   w_ref: (H, tn)   b_ref: (1, tn) f32   o_ref: (tm, tn)
    # Linear: x @ W + b (MXU, f32 accumulation; bias folded into the accumulator once).
    y = jnp.dot(x_ref[...], w_ref[...], preferred_element_type=jnp.float32) + b_ref[...]
    if approximate_gelu:
        # tanh-approx GELU: exp/tanh issue on the otherwise-idle EUP slot, freeing the
        # VALU slot that the erf polynomial saturates once the bf16 MXU path is fast.
        # Only valid when model semantics allow (OpenAI-GPT-style gelu).
        g = 0.5 * y * (1.0 + jnp.tanh(_TANH_C * (y + 0.044715 * (y * y * y))))
    else:
        # Exact GELU (module semantics): y * 0.5 * (1 + erf(y / sqrt(2))).
        g = y * (0.5 * (1.0 + jax.lax.erf(y * _INV_SQRT2)))
    o_ref[...] = g.astype(o_ref.dtype)


@functools.partial(
    jax.jit,
    static_argnames=("tm", "tn", "mxu_dtype", "vmem_limit_bytes",
                     "approximate_gelu", "single_buffer_weight"),
)
def _bert_intermediate_call(hidden_states, weight, bias, *, tm, tn, mxu_dtype,
                            vmem_limit_bytes, approximate_gelu, single_buffer_weight):
    B, S, H = hidden_states.shape
    N = weight.shape[1]
    M = B * S
    out_dtype = hidden_states.dtype

    x2d = hidden_states.reshape(M, H)
    b2d = bias.reshape(1, N).astype(jnp.float32)   # pre-cast; added once per tile in f32
    if mxu_dtype is not None:
        # Skip the cast when the model already runs in mxu_dtype (no extra HBM round
        # trip over the activations).  For inference, store W in mxu_dtype caller-side.
        if x2d.dtype != mxu_dtype:
            x2d = x2d.astype(mxu_dtype)
        if weight.dtype != mxu_dtype:
            weight = weight.astype(mxu_dtype)

    # Grid: N tiles OUTER, M tiles INNER -> the (H, tn) weight block index is constant
    # across the inner M loop, so each weight column tile is fetched only cdiv(N, tn)
    # times total (never re-streamed per M tile).
    grid = (pl.cdiv(N, tn), pl.cdiv(M, tm))

    w_spec_kwargs = {}
    if single_buffer_weight:
        # Weight index only changes once per outer N step; double-buffering it buys
        # nothing but doubles its VMEM footprint.
        w_spec_kwargs["pipeline_mode"] = pl.Buffered(1)

    cost = pl.CostEstimate(
        flops=2 * M * N * H + M * N,
        transcendentals=M * N,
        bytes_accessed=(x2d.size * x2d.dtype.itemsize
                        + weight.size * weight.dtype.itemsize
                        + b2d.size * 4
                        + M * N * jnp.dtype(out_dtype).itemsize),
    )

    out2d = pl.pallas_call(
        functools.partial(_bert_intermediate_kernel, approximate_gelu=approximate_gelu),
        out_shape=jax.ShapeDtypeStruct((M, N), out_dtype),
        grid_spec=pltpu.PrefetchScalarGridSpec(
            num_scalar_prefetch=0,
            grid=grid,
            in_specs=[
                pl.BlockSpec((tm, H), lambda j, i: (i, 0)),                   # x row tile
                pl.BlockSpec((H, tn), lambda j, i: (0, j), **w_spec_kwargs),  # W col tile
                pl.BlockSpec((1, tn), lambda j, i: (0, j)),                   # bias (f32)
            ],
            out_specs=pl.BlockSpec((tm, tn), lambda j, i: (i, j)),
        ),
        compiler_params=pltpu.CompilerParams(
            # Every grid step owns an independent output tile (no cross-step
            # accumulation), so both axes are 'parallel' (megacore sharding on v7x).
            dimension_semantics=("parallel", "parallel"),
            vmem_limit_bytes=vmem_limit_bytes,
        ),
        cost_estimate=cost,
    )(x2d, weight, b2d)

    return out2d.reshape(B, S, N)


def bert_intermediate(hidden_states, weight, bias, *, block_m=None, block_n=None,
                      mxu_dtype=jnp.bfloat16, approximate_gelu=False,
                      vmem_limit_bytes=None, single_buffer_weight=False):
    """BertIntermediate forward: GELU(hidden_states @ weight + bias).

    hidden_states: (B, S, H); weight: (H, N) == torch nn.Linear.weight.T; bias: (N,).
    mxu_dtype=bf16 (default) feeds the MXU in bf16 with f32 accumulation and an f32
    GELU epilogue; mxu_dtype=None gives bit-exact f32 module numerics.
    """
    B, S, H = hidden_states.shape
    N = weight.shape[1]
    M = B * S

    x_item = jnp.dtype(mxu_dtype if mxu_dtype is not None else hidden_states.dtype).itemsize
    w_item = jnp.dtype(mxu_dtype if mxu_dtype is not None else weight.dtype).itemsize
    o_item = jnp.dtype(hidden_states.dtype).itemsize
    w_buffers = 1 if single_buffer_weight else 2

    # Per-generation defaults from physical VMEM (v5e/v6e: 128 MiB, v7x: 64 MiB)
    # instead of a one-size-fits-all cap.
    vmem_cap = _physical_vmem_bytes()
    small_vmem = vmem_cap <= 64 * 1024 * 1024          # v7x-class TensorCore
    if vmem_limit_bytes is None:
        # ~48 MiB scoped limit on v7x, ~96 MiB on v5e/v6e: headroom for Mosaic internals.
        vmem_limit_bytes = min((vmem_cap * 3) // 4, 100 * 1024 * 1024)

    if block_m is None:
        block_m = 256 if small_vmem else 512           # 256-aligned for the 2x256 MXU
    tm = M if M <= block_m else max(8, (block_m // 8) * 8)   # sublane-aligned when tiled

    # Lane-dense, MXU-native N tiles: full N when the working set fits the VMEM budget,
    # otherwise the largest 256-aligned column tile that does.
    if N <= _LANE_ALIGN:
        tn = N
    elif block_n is not None:
        tn = min(N, max(_LANE_ALIGN, (block_n // _LANE_ALIGN) * _LANE_ALIGN))
    else:
        tn = N
        while (tn > _LANE_ALIGN and
               _vmem_working_set(tm, tn, H, x_item, w_item, o_item, w_buffers)
               > vmem_limit_bytes):
            tn = max(_LANE_ALIGN, ((tn // 2) // _LANE_ALIGN) * _LANE_ALIGN)

    return _bert_intermediate_call(
        hidden_states, weight, bias,
        tm=int(tm), tn=int(tn), mxu_dtype=mxu_dtype,
        vmem_limit_bytes=int(vmem_limit_bytes),
        approximate_gelu=approximate_gelu,
        single_buffer_weight=single_buffer_weight,
    )


def reference(hidden_states, weight, bias):
    y = jnp.einsum("bsh,hn->bsn", hidden_states, weight) + bias
    return y * 0.5 * (1.0 + jax.lax.erf(y / math.sqrt(2.0)))


if __name__ == "__main__":
    # Small config consistent with BertIntermediate: hidden_dim=32, inter_dim=64.
    batch, seq, hidden_dim, inter_dim = 2, 8, 32, 64

    key = jax.random.PRNGKey(0)
    kx, kw, kb = jax.random.split(key, 3)

    # Deterministic "parameter init" (nn.Linear shapes: weight (inter, hidden), bias
    # (inter,)); we store the transposed weight (hidden, inter) for the x @ W layout.
    x = jax.random.normal(kx, (batch, seq, hidden_dim), dtype=jnp.float32)
    bound = 1.0 / math.sqrt(hidden_dim)
    w = jax.random.uniform(kw, (hidden_dim, inter_dim), minval=-bound, maxval=bound,
                           dtype=jnp.float32)
    b = jax.random.uniform(kb, (inter_dim,), minval=-bound, maxval=bound,
                           dtype=jnp.float32)

    ref = reference(x, w, b)

    # Default (recommended) path: bf16 MXU inputs, f32 accumulation, exact erf GELU.
    out = jax.block_until_ready(bert_intermediate(x, w, b))
    assert out.shape == (batch, seq, inter_dim)
    assert out.dtype == x.dtype
    assert jnp.allclose(out, ref, atol=2e-2, rtol=2e-2)

    # Bit-exact f32 path (matches the torch module's f32 numerics tightly).
    out_f32 = jax.block_until_ready(bert_intermediate(x, w, b, mxu_dtype=None))
    assert jnp.allclose(out_f32, ref, atol=1e-5, rtol=1e-5)

    print("KERNEL_OK")
</pallas_src>

<mosaic_0001>
module attributes {stable_mosaic.version = 11 : i64} {
  func.func @_bert_intermediate_kernel(%arg0: i32, %arg1: i32, %arg2: memref<16x32xbf16, #tpu.memory_space<vmem>>, %arg3: memref<32x64xbf16, #tpu.memory_space<vmem>>, %arg4: memref<1x64xf32, #tpu.memory_space<vmem>>, %arg5: memref<16x64xf32, #tpu.memory_space<vmem>>) attributes {dimension_semantics = [#tpu.dimension_semantics<parallel>, #tpu.dimension_semantics<parallel>], iteration_bounds = array<i64: 1, 1>, scalar_prefetch = 0 : i64, scratch_operands = 0 : i64, tpu.core_type = #tpu.core_type<tc>, window_params = [{transform_indices = @transform_0, window_bounds = array<i64: 16, 32>}, {transform_indices = @transform_1, window_bounds = array<i64: 32, 64>}, {transform_indices = @transform_2, window_bounds = array<i64: 1, 64>}, {transform_indices = @transform_3, window_bounds = array<i64: 16, 64>}]} {
    %c0 = arith.constant 0 : index
    %c0_0 = arith.constant 0 : index
    %0 = vector.load %arg2[%c0, %c0_0] : memref<16x32xbf16, #tpu.memory_space<vmem>>, vector<16x32xbf16>
    %c0_1 = arith.constant 0 : index
    %c0_2 = arith.constant 0 : index
    %1 = vector.load %arg3[%c0_1, %c0_2] : memref<32x64xbf16, #tpu.memory_space<vmem>>, vector<32x64xbf16>
    %cst = arith.constant dense<0.000000e+00> : vector<16x64xf32>
    %2 = tpu.matmul %0, %1, %cst {dimension_numbers = #tpu.dot_dimension_numbers<[1], [0], [0], [1], [0, 0, 1, 1], [], []>} : vector<16x32xbf16>, vector<32x64xbf16>, vector<16x64xf32> -> vector<16x64xf32>
    %c0_3 = arith.constant 0 : index
    %c0_4 = arith.constant 0 : index
    %3 = vector.load %arg4[%c0_3, %c0_4] : memref<1x64xf32, #tpu.memory_space<vmem>>, vector<1x64xf32>
    %4 = vector.broadcast %3 : vector<1x64xf32> to vector<16x64xf32>
    %5 = arith.addf %2, %4 : vector<16x64xf32>
    %cst_5 = arith.constant 0.707106769 : f32
    %6 = vector.broadcast %cst_5 : f32 to vector<16x64xf32>
    %7 = arith.mulf %5, %6 : vector<16x64xf32>
    %8 = math.erf %7 : vector<16x64xf32>
    %cst_6 = arith.constant 1.000000e+00 : f32
    %9 = vector.broadcast %cst_6 : f32 to vector<16x64xf32>
    %10 = arith.addf %9, %8 : vector<16x64xf32>
    %cst_7 = arith.constant 5.000000e-01 : f32
    %11 = vector.broadcast %cst_7 : f32 to vector<16x64xf32>
    %12 = arith.mulf %11, %10 : vector<16x64xf32>
    %13 = arith.mulf %5, %12 : vector<16x64xf32>
    %c0_8 = arith.constant 0 : index
    %c0_9 = arith.constant 0 : index
    %14 = vector.load %arg5[%c0_8, %c0_9] : memref<16x64xf32, #tpu.memory_space<vmem>>, vector<16x64xf32>
    tpu.vector_store %arg5[%c0_8, %c0_9], %13 {strides = array<i32>} : memref<16x64xf32, #tpu.memory_space<vmem>>, vector<16x64xf32>,
    return
  }
  func.func @transform_0(%arg0: i32, %arg1: i32) -> (i32, i32) {
    %c0_i32 = arith.constant 0 : i32
    %c0_i32_0 = arith.constant 0 : i32
    return %arg1, %c0_i32 : i32, i32
  }
  func.func @transform_1(%arg0: i32, %arg1: i32) -> (i32, i32) {
    %c0_i32 = arith.constant 0 : i32
    %c0_i32_0 = arith.constant 0 : i32
    return %c0_i32, %arg0 : i32, i32
  }
  func.func @transform_2(%arg0: i32, %arg1: i32) -> (i32, i32) {
    %c0_i32 = arith.constant 0 : i32
    %c0_i32_0 = arith.constant 0 : i32
    return %c0_i32, %arg0 : i32, i32
  }
  func.func @transform_3(%arg0: i32, %arg1: i32) -> (i32, i32) {
    %c0_i32 = arith.constant 0 : i32
    return %arg1, %arg0 : i32, i32
  }
}

</mosaic_0001>

<llo_original>
// kernel: _bert_intermediate_call.1
$region0: #{_bert_intermediate_call.1}
  #allocation0 [shape = 'u32[]', space=smem, size = 0x4, offset = 0x4, fixed_abs, tag = 'smem constant byte address 0x4 - core index']
  #allocation1 [shape = 'u32[144,128]{1,0:T(1,128)}', space=vmem, size = 0x12000, scoped, tag = 'internal scratch']
  %s0 = inlined_call_operand.vmem [shape: bf16[16,32], index: 0, kind: input, shape index: {}]
  %s1 = inlined_call_operand.vmem [shape: bf16[32,64], index: 1, kind: input, shape index: {}]
  %s2 = inlined_call_operand.vmem [shape: f32[1,64], index: 2, kind: input, shape index: {}]
  %s3 = inlined_call_operand.hbm [shape: f32[16,64], index: 3, kind: output, shape index: {}]
  %s4 = sld [smem:[#allocation0]]
  $region22: #{_bert_intermediate_call.1} parent=0
    _
  %s6 = ssub.s32 1, %s4
  %s7 = scalar_select 0, %s6, %s4
  $region1: #{_bert_intermediate_call.1} parent=0
    #allocation2 [shape = 'u8[8192]{0}', space=vmem, size = 0x2000, scoped, tag = 'output window, operand 0, single buffered']
    #allocation3 [shape = 's32[1]{0}', space=sflag, size = 0x4, scoped, tag = 'scoped memory for _bert_intermediate_call.1']
    %8 = vsyncpa [#allocation3], 0
    // Predicated region
    $region2: #{_bert_intermediate_call.1} parent=1 // pred_check
      _
    $region3: #{_bert_intermediate_call.1} parent=1 // pred_check_branch
      %10 = sbr.rel (0) target = $region5
    $region4: #{_bert_intermediate_call.1} parent=1 // pred_region
      _
    $region5: #{_bert_intermediate_call.1} parent=1 // pred_fallthru
      _
    // Predicated region
    $region6: #{_bert_intermediate_call.1} parent=1 // pred_check
      _
    $region7: #{_bert_intermediate_call.1} parent=1 // pred_check_branch
      %12 = sbr.rel (0) target = $region9
    $region8: #{_bert_intermediate_call.1} parent=1 // pred_region
      _
    $region9: #{_bert_intermediate_call.1} parent=1 // pred_fallthru
      _
    // Predicated region
    $region10: #{_bert_intermediate_call.1} parent=1 // pred_check
      _
    $region11: #{_bert_intermediate_call.1} parent=1 // pred_check_branch
      %14 = sbr.rel (0) target = $region13
    $region12: #{_bert_intermediate_call.1} parent=1 // pred_region
      _
    $region13: #{_bert_intermediate_call.1} parent=1 // pred_fallthru
      _
    %v16 = vld [vmem:[%s0] sm:$0xf]
    %v17 = vld [vmem:[%s0 + $0x4] sm:$0xf]
    %v18 = vld [vmem:[%s1] sm:$0xf]
    %v19 = vld [vmem:[%s1 + $0x4] sm:$0xf]
    %v20 = vld [vmem:[%s1 + $0x8] sm:$0xf]
    %v21 = vld [vmem:[%s1 + $0xc] sm:$0xf]
    %v22 = vld [vmem:[%s2] sm:$0x1]
    %v24 = vlaneseq
    %v25 = vshrl.u32 %v24, 7
    %v26 = vsub.s32 0, %v25
    %v27 = vrot.slane %v22, %v26
    %v31 = vunpack.c.l.b16 %v16
    %v32 = vunpack.c.l.b16 %v17
    %v33 = vpack.c.b16 %v32, %v31
    %v38 = vunpack.c.l.b16 %v18
    %v39 = vunpack.c.l.b16 %v19
    %v40 = vunpack.c.l.b16 %v20
    %v41 = vunpack.c.l.b16 %v21
    %v42 = vpack.c.b16 %v39, %v38
    %v43 = vpack.c.b16 %v41, %v40
    %vm46 = vcmask 261120
    %v48 = vsel %vm46, %v33, 0
    %50 = vmatprep.subr.bf16.mxu0 0
    %51 = vmatpush1.bf16.msra.mxu0 %v42
    %52 = vmatprep.subr.bf16.mxu0 0
    %53 = vmatpush1.bf16.msra.mxu0 %v43
    %54 = vmatprep.subr.bf16.mxu0 0
    %55 = vmatpush1.bf16.msra.mxu0 0
    %56 = vmatprep.subr.bf16.mxu0 0
    %57 = vmatpush1.bf16.msra.mxu0 0
    %58 = vmatprep.subr.bf16.mxu0 0
    %59 = vmatpush1.bf16.msra.mxu0 0
    %60 = vmatprep.subr.bf16.mxu0 0
    %61 = vmatpush1.bf16.msra.mxu0 0
    %62 = vmatprep.subr.bf16.mxu0 0
    %63 = vmatpush1.bf16.msra.mxu0 0
    %64 = vmatprep.subr.bf16.mxu0 0
    %65 = vmatpush1.bf16.msra.mxu0 0
    %66 = vmatprep.subr.bf16.mxu0 0
    %67 = vmatpush1.bf16.msra.mxu0 0
    %68 = vmatprep.subr.bf16.mxu0 0
    %69 = vmatpush1.bf16.msra.mxu0 0
    %70 = vmatprep.subr.bf16.mxu0 0
    %71 = vmatpush1.bf16.msra.mxu0 0
    %72 = vmatprep.subr.bf16.mxu0 0
    %73 = vmatpush1.bf16.msra.mxu0 0
    %74 = vmatprep.subr.bf16.mxu0 0
    %75 = vmatpush1.bf16.msra.mxu0 0
    %76 = vmatprep.subr.bf16.mxu0 0
    %77 = vmatpush1.bf16.msra.mxu0 0
    %78 = vmatprep.subr.bf16.mxu0 0
    %79 = vmatpush1.bf16.msra.mxu0 0
    %80 = vmatprep.subr.bf16.mxu0 0
    %81 = vmatpush1.bf16.msra.mxu0 0
    %82 = vmatprep.mubr.bf16.mxu0 0
    %83 = vmatmul.mubr.bf16.gmra.mrb[0].mxu0 %v48
    %v84 = vpop.f32.mrb[0].mxu0
    %v85 = vadd.f32 %v27, %v84
    %v86 = vpop.f32.mrb[0].mxu0
    %v87 = vpop.f32.mrb[0].mxu0
    %v88 = vadd.f32 %v27, %v87
    %v89 = vpop.f32.mrb[0].mxu0
    %90 = vdwg.mxu0
    %v91 = vmul.f32 %v85, 0.70710677
    %v92 = vmul.f32 %v88, 0.70710677
    %v93 = verf.f32.pop %v91
    %v94 = verf.f32.pop %v92
    %v95 = vadd.f32 %v93, 1.0
    %v96 = vadd.f32 %v94, 1.0
    %v97 = vmul.f32 %v95, 0.5
    %v98 = vmul.f32 %v96, 0.5
    %v99 = vmul.f32 %v85, %v97
    %v100 = vmul.f32 %v88, %v98
    %vm101 = vcmask 523264
    %102 = vst.msk [vmem:[#allocation2] sm:$0xff] %vm101, %v99
    %103 = vst.msk [vmem:[#allocation2 + $0x8] sm:$0xff] %vm101, %v100
    // Predicated region
    $region14: #{_bert_intermediate_call.1} parent=1 // pred_check
      _
    $region15: #{_bert_intermediate_call.1} parent=1 // pred_check_branch
      %105 = sbr.rel (0) target = $region17
    $region16: #{_bert_intermediate_call.1} parent=1 // pred_region
      %s107 = ssub.s32 256, 256
      %108 = vsyncadd [#allocation3], %s107
      %s109 = sshll.u32 [#allocation2], 4
      %s110 = int_to_ptr.vmem [resolvable:$true] %s109
      %115 = dma.vmem_to_hbm [thread:$0]  %s110, 256, %s3, [#allocation3], 128, 128, 8
    $region17: #{_bert_intermediate_call.1} parent=1 // pred_fallthru
      _
    // Predicated region
    $region18: #{_bert_intermediate_call.1} parent=1 // pred_check
      _
    $region19: #{_bert_intermediate_call.1} parent=1 // pred_check_branch
      %117 = sbr.rel (0) target = $region21
    $region20: #{_bert_intermediate_call.1} parent=1 // pred_region
      %118 = dma.done [#allocation3], 256
    $region21: #{_bert_intermediate_call.1} parent=1 // pred_fallthru
      _
    %119 = vsyncpa [#allocation3], 1

</llo_original>
